<compile_context>
chip_gen: v6e
topology: v6e:2x2x1
jax: 0.10.0
libtpu: 0.0.40
codegen_flags: <defaults>
</compile_context>

<pallas_src>
import jax
import jax.numpy as jnp
from jax.experimental import pallas as pl
from jax.experimental.pallas import tpu as pltpu

# ----------------------------- model config ---------------------------------
NUM_EMBEDDINGS = 1000      # vocab size of the EmbeddingBag
EMB_DIM        = 64        # embedding_dim
BASE_DIM       = 128       # base_dim (EMB_DIM < BASE_DIM -> bias-free proj Linear)
BAG_SIZE       = 4         # indices per bag (2-D input, offsets=None)
BATCH          = 16
TILE_B         = 16        # batch rows per grid step (full batch -> grid=(1,))


# ------------------------------ Pallas kernel --------------------------------
def _emb_linear_kernel(idx_ref,    # SMEM (BATCH*BAG_SIZE,) int32 [scalar prefetch]
                       emb_ref,    # VMEM (NUM_EMBEDDINGS, EMB_DIM) f32, resident
                       w_ref,      # VMEM (EMB_DIM, BASE_DIM) bf16, resident
                       out_ref,    # VMEM (TILE_B, BASE_DIM) f32
                       xbuf):      # VMEM (TILE_B, EMB_DIM) f32 scratch
    i = pl.program_id(0)
    base = i * TILE_B

    # ---- EmbeddingBag(mode='sum'): in-VMEM gather of BAG_SIZE rows per
    #      output row, summed in f32 (cheap VPU adds, statically unrolled).
    for r in range(TILE_B):
        off = (base + r) * BAG_SIZE
        acc = emb_ref[pl.ds(idx_ref[off], 1), :]
        for j in range(1, BAG_SIZE):
            acc = acc + emb_ref[pl.ds(idx_ref[off + j], 1), :]
        xbuf[r:r + 1, :] = acc                                # (1, EMB_DIM) f32

    # ---- bias-free projection: y = x @ W  (bf16 MXU operands, f32 accumulate)
    out_ref[...] = jnp.dot(xbuf[...].astype(jnp.bfloat16), w_ref[...],
                           preferred_element_type=jnp.float32)


# ------------------------------- wrapper -------------------------------------
@jax.jit
def embedding_linear_forward(indices, emb_table, w_proj):
    B, bag = indices.shape
    assert bag == BAG_SIZE
    assert B % TILE_B == 0, "batch must be a multiple of the batch tile"
    grid = (B // TILE_B,)

    # flat 1-D int32 indices -> tiny SMEM footprint, simple scalar addressing.
    idx_flat = indices.reshape(-1).astype(jnp.int32)

    return pl.pallas_call(
        _emb_linear_kernel,
        out_shape=jax.ShapeDtypeStruct((B, BASE_DIM), jnp.float32),
        grid_spec=pltpu.PrefetchScalarGridSpec(
            num_scalar_prefetch=1,                       # indices -> SMEM
            grid=grid,
            in_specs=[
                # embedding table: one streaming DMA, VMEM-resident across tiles.
                pl.BlockSpec((NUM_EMBEDDINGS, EMB_DIM), lambda i, idx: (0, 0)),
                # projection weight: DMA'd once, VMEM-resident across tiles.
                pl.BlockSpec((EMB_DIM, BASE_DIM), lambda i, idx: (0, 0)),
            ],
            out_specs=pl.BlockSpec((TILE_B, BASE_DIM), lambda i, idx: (i, 0)),
            scratch_shapes=[
                pltpu.VMEM((TILE_B, EMB_DIM), jnp.float32),
            ],
        ),
        compiler_params=pltpu.CompilerParams(
            dimension_semantics=("arbitrary",)),
    )(idx_flat, emb_table, w_proj)


# ---------------------------------- main -------------------------------------
if __name__ == "__main__":
    key = jax.random.PRNGKey(0)
    k_emb, k_w, k_idx = jax.random.split(key, 3)

    # torch.nn.init.xavier_uniform_ equivalents.
    emb_lim = (6.0 / (NUM_EMBEDDINGS + EMB_DIM)) ** 0.5
    emb_table = jax.random.uniform(k_emb, (NUM_EMBEDDINGS, EMB_DIM),
                                   jnp.float32, -emb_lim, emb_lim)

    w_lim = (6.0 / (EMB_DIM + BASE_DIM)) ** 0.5
    # stored (in, out) = transpose of PyTorch's (out, in); bf16 per perf review.
    w_proj = jax.random.uniform(k_w, (EMB_DIM, BASE_DIM),
                                jnp.float32, -w_lim, w_lim).astype(jnp.bfloat16)

    # EmbeddingBag input with offsets=None: 2-D (batch, bag_size) index tensor.
    indices = jax.random.randint(k_idx, (BATCH, BAG_SIZE), 0, NUM_EMBEDDINGS,
                                 dtype=jnp.int32)

    out = embedding_linear_forward(indices, emb_table, w_proj)
    jax.block_until_ready(out)

    # pure-JAX f32 reference (bf16 weight introduces small, bounded drift).
    ref = emb_table[indices].sum(axis=1) @ w_proj.astype(jnp.float32)

    assert out.shape == (BATCH, BASE_DIM), out.shape
    assert out.dtype == jnp.float32
    assert jnp.allclose(out, ref, rtol=2e-2, atol=2e-3), \
        float(jnp.max(jnp.abs(out - ref)))
    print("KERNEL_OK")
</pallas_src>

<mosaic_0001>
module attributes {stable_mosaic.version = 11 : i64} {
  func.func @_emb_linear_kernel(%arg0: i32, %arg1: memref<64xi32, #tpu.memory_space<smem>>, %arg2: memref<1000x64xf32, #tpu.memory_space<vmem>>, %arg3: memref<64x128xbf16, #tpu.memory_space<vmem>>, %arg4: memref<16x128xf32, #tpu.memory_space<vmem>>, %arg5: memref<16x64xf32, #tpu.memory_space<vmem>>) attributes {dimension_semantics = [#tpu.dimension_semantics<arbitrary>], iteration_bounds = array<i64: 1>, scalar_prefetch = 1 : i64, scratch_operands = 1 : i64, tpu.core_type = #tpu.core_type<tc>, window_params = [{pipeline_mode = #tpu.pipeline_mode<synchronous>, transform_indices = @transform_0, window_bounds = array<i64: 1000, 64>}, {pipeline_mode = #tpu.pipeline_mode<synchronous>, transform_indices = @transform_1, window_bounds = array<i64: 64, 128>}, {transform_indices = @transform_2, window_bounds = array<i64: 16, 128>}]} {
    %c16_i32 = arith.constant 16 : i32
    %0 = arith.muli %arg0, %c16_i32 : i32
    %c0_i32 = arith.constant 0 : i32
    %1 = arith.addi %0, %c0_i32 : i32
    %c4_i32 = arith.constant 4 : i32
    %2 = arith.muli %1, %c4_i32 : i32
    %3 = arith.index_cast %2 : i32 to index
    %4 = memref.load %arg1[%3] : memref<64xi32, #tpu.memory_space<smem>>
    %5 = arith.index_cast %4 : i32 to index
    %c0 = arith.constant 0 : index
    %6 = vector.load %arg2[%5, %c0] : memref<1000x64xf32, #tpu.memory_space<vmem>>, vector<1x64xf32>
    %c1_i32 = arith.constant 1 : i32
    %7 = arith.addi %2, %c1_i32 : i32
    %8 = arith.index_cast %7 : i32 to index
    %9 = memref.load %arg1[%8] : memref<64xi32, #tpu.memory_space<smem>>
    %10 = arith.index_cast %9 : i32 to index
    %c0_0 = arith.constant 0 : index
    %11 = vector.load %arg2[%10, %c0_0] : memref<1000x64xf32, #tpu.memory_space<vmem>>, vector<1x64xf32>
    %12 = arith.addf %6, %11 : vector<1x64xf32>
    %c2_i32 = arith.constant 2 : i32
    %13 = arith.addi %2, %c2_i32 : i32
    %14 = arith.index_cast %13 : i32 to index
    %15 = memref.load %arg1[%14] : memref<64xi32, #tpu.memory_space<smem>>
    %16 = arith.index_cast %15 : i32 to index
    %c0_1 = arith.constant 0 : index
    %17 = vector.load %arg2[%16, %c0_1] : memref<1000x64xf32, #tpu.memory_space<vmem>>, vector<1x64xf32>
    %18 = arith.addf %12, %17 : vector<1x64xf32>
    %c3_i32 = arith.constant 3 : i32
    %19 = arith.addi %2, %c3_i32 : i32
    %20 = arith.index_cast %19 : i32 to index
    %21 = memref.load %arg1[%20] : memref<64xi32, #tpu.memory_space<smem>>
    %22 = arith.index_cast %21 : i32 to index
    %c0_2 = arith.constant 0 : index
    %23 = vector.load %arg2[%22, %c0_2] : memref<1000x64xf32, #tpu.memory_space<vmem>>, vector<1x64xf32>
    %24 = arith.addf %18, %23 : vector<1x64xf32>
    %c0_3 = arith.constant 0 : index
    %c0_4 = arith.constant 0 : index
    %25 = vector.load %arg5[%c0_3, %c0_4] : memref<16x64xf32, #tpu.memory_space<vmem>>, vector<1x64xf32>
    tpu.vector_store %arg5[%c0_3, %c0_4], %24 {strides = array<i32>} : memref<16x64xf32, #tpu.memory_space<vmem>>, vector<1x64xf32>,
    %c1_i32_5 = arith.constant 1 : i32
    %26 = arith.addi %0, %c1_i32_5 : i32
    %c4_i32_6 = arith.constant 4 : i32
    %27 = arith.muli %26, %c4_i32_6 : i32
    %28 = arith.index_cast %27 : i32 to index
    %29 = memref.load %arg1[%28] : memref<64xi32, #tpu.memory_space<smem>>
    %30 = arith.index_cast %29 : i32 to index
    %c0_7 = arith.constant 0 : index
    %31 = vector.load %arg2[%30, %c0_7] : memref<1000x64xf32, #tpu.memory_space<vmem>>, vector<1x64xf32>
    %c1_i32_8 = arith.constant 1 : i32
    %32 = arith.addi %27, %c1_i32_8 : i32
    %33 = arith.index_cast %32 : i32 to index
    %34 = memref.load %arg1[%33] : memref<64xi32, #tpu.memory_space<smem>>
    %35 = arith.index_cast %34 : i32 to index
    %c0_9 = arith.constant 0 : index
    %36 = vector.load %arg2[%35, %c0_9] : memref<1000x64xf32, #tpu.memory_space<vmem>>, vector<1x64xf32>
    %37 = arith.addf %31, %36 : vector<1x64xf32>
    %c2_i32_10 = arith.constant 2 : i32
    %38 = arith.addi %27, %c2_i32_10 : i32
    %39 = arith.index_cast %38 : i32 to index
    %40 = memref.load %arg1[%39] : memref<64xi32, #tpu.memory_space<smem>>
    %41 = arith.index_cast %40 : i32 to index
    %c0_11 = arith.constant 0 : index
    %42 = vector.load %arg2[%41, %c0_11] : memref<1000x64xf32, #tpu.memory_space<vmem>>, vector<1x64xf32>
    %43 = arith.addf %37, %42 : vector<1x64xf32>
    %c3_i32_12 = arith.constant 3 : i32
    %44 = arith.addi %27, %c3_i32_12 : i32
    %45 = arith.index_cast %44 : i32 to index
    %46 = memref.load %arg1[%45] : memref<64xi32, #tpu.memory_space<smem>>
    %47 = arith.index_cast %46 : i32 to index
    %c0_13 = arith.constant 0 : index
    %48 = vector.load %arg2[%47, %c0_13] : memref<1000x64xf32, #tpu.memory_space<vmem>>, vector<1x64xf32>
    %49 = arith.addf %43, %48 : vector<1x64xf32>
    %c1 = arith.constant 1 : index
    %c0_14 = arith.constant 0 : index
    %50 = vector.load %arg5[%c1, %c0_14] : memref<16x64xf32, #tpu.memory_space<vmem>>, vector<1x64xf32>
    tpu.vector_store %arg5[%c1, %c0_14], %49 {strides = array<i32>} : memref<16x64xf32, #tpu.memory_space<vmem>>, vector<1x64xf32>,
    %c2_i32_15 = arith.constant 2 : i32
    %51 = arith.addi %0, %c2_i32_15 : i32
    %c4_i32_16 = arith.constant 4 : i32
    %52 = arith.muli %51, %c4_i32_16 : i32
    %53 = arith.index_cast %52 : i32 to index
    %54 = memref.load %arg1[%53] : memref<64xi32, #tpu.memory_space<smem>>
    %55 = arith.index_cast %54 : i32 to index
    %c0_17 = arith.constant 0 : index
    %56 = vector.load %arg2[%55, %c0_17] : memref<1000x64xf32, #tpu.memory_space<vmem>>, vector<1x64xf32>
    %c1_i32_18 = arith.constant 1 : i32
    %57 = arith.addi %52, %c1_i32_18 : i32
    %58 = arith.index_cast %57 : i32 to index
    %59 = memref.load %arg1[%58] : memref<64xi32, #tpu.memory_space<smem>>
    %60 = arith.index_cast %59 : i32 to index
    %c0_19 = arith.constant 0 : index
    %61 = vector.load %arg2[%60, %c0_19] : memref<1000x64xf32, #tpu.memory_space<vmem>>, vector<1x64xf32>
    %62 = arith.addf %56, %61 : vector<1x64xf32>
    %c2_i32_20 = arith.constant 2 : i32
    %63 = arith.addi %52, %c2_i32_20 : i32
    %64 = arith.index_cast %63 : i32 to index
    %65 = memref.load %arg1[%64] : memref<64xi32, #tpu.memory_space<smem>>
    %66 = arith.index_cast %65 : i32 to index
    %c0_21 = arith.constant 0 : index
    %67 = vector.load %arg2[%66, %c0_21] : memref<1000x64xf32, #tpu.memory_space<vmem>>, vector<1x64xf32>
    %68 = arith.addf %62, %67 : vector<1x64xf32>
    %c3_i32_22 = arith.constant 3 : i32
    %69 = arith.addi %52, %c3_i32_22 : i32
    %70 = arith.index_cast %69 : i32 to index
    %71 = memref.load %arg1[%70] : memref<64xi32, #tpu.memory_space<smem>>
    %72 = arith.index_cast %71 : i32 to index
    %c0_23 = arith.constant 0 : index
    %73 = vector.load %arg2[%72, %c0_23] : memref<1000x64xf32, #tpu.memory_space<vmem>>, vector<1x64xf32>
    %74 = arith.addf %68, %73 : vector<1x64xf32>
    %c2 = arith.constant 2 : index
    %c0_24 = arith.constant 0 : index
    %75 = vector.load %arg5[%c2, %c0_24] : memref<16x64xf32, #tpu.memory_space<vmem>>, vector<1x64xf32>
    tpu.vector_store %arg5[%c2, %c0_24], %74 {strides = array<i32>} : memref<16x64xf32, #tpu.memory_space<vmem>>, vector<1x64xf32>,
    %c3_i32_25 = arith.constant 3 : i32
    %76 = arith.addi %0, %c3_i32_25 : i32
    %c4_i32_26 = arith.constant 4 : i32
    %77 = arith.muli %76, %c4_i32_26 : i32
    %78 = arith.index_cast %77 : i32 to index
    %79 = memref.load %arg1[%78] : memref<64xi32, #tpu.memory_space<smem>>
    %80 = arith.index_cast %79 : i32 to index
    %c0_27 = arith.constant 0 : index
    %81 = vector.load %arg2[%80, %c0_27] : memref<1000x64xf32, #tpu.memory_space<vmem>>, vector<1x64xf32>
    %c1_i32_28 = arith.constant 1 : i32
    %82 = arith.addi %77, %c1_i32_28 : i32
    %83 = arith.index_cast %82 : i32 to index
    %84 = memref.load %arg1[%83] : memref<64xi32, #tpu.memory_space<smem>>
    %85 = arith.index_cast %84 : i32 to index
    %c0_29 = arith.constant 0 : index
    %86 = vector.load %arg2[%85, %c0_29] : memref<1000x64xf32, #tpu.memory_space<vmem>>, vector<1x64xf32>
    %87 = arith.addf %81, %86 : vector<1x64xf32>
    %c2_i32_30 = arith.constant 2 : i32
    %88 = arith.addi %77, %c2_i32_30 : i32
    %89 = arith.index_cast %88 : i32 to index
    %90 = memref.load %arg1[%89] : memref<64xi32, #tpu.memory_space<smem>>
    %91 = arith.index_cast %90 : i32 to index
    %c0_31 = arith.constant 0 : index
    %92 = vector.load %arg2[%91, %c0_31] : memref<1000x64xf32, #tpu.memory_space<vmem>>, vector<1x64xf32>
    %93 = arith.addf %87, %92 : vector<1x64xf32>
    %c3_i32_32 = arith.constant 3 : i32
    %94 = arith.addi %77, %c3_i32_32 : i32
    %95 = arith.index_cast %94 : i32 to index
    %96 = memref.load %arg1[%95] : memref<64xi32, #tpu.memory_space<smem>>
    %97 = arith.index_cast %96 : i32 to index
    %c0_33 = arith.constant 0 : index
    %98 = vector.load %arg2[%97, %c0_33] : memref<1000x64xf32, #tpu.memory_space<vmem>>, vector<1x64xf32>
    %99 = arith.addf %93, %98 : vector<1x64xf32>
    %c3 = arith.constant 3 : index
    %c0_34 = arith.constant 0 : index
    %100 = vector.load %arg5[%c3, %c0_34] : memref<16x64xf32, #tpu.memory_space<vmem>>, vector<1x64xf32>
    tpu.vector_store %arg5[%c3, %c0_34], %99 {strides = array<i32>} : memref<16x64xf32, #tpu.memory_space<vmem>>, vector<1x64xf32>,
    %c4_i32_35 = arith.constant 4 : i32
    %101 = arith.addi %0, %c4_i32_35 : i32
    %c4_i32_36 = arith.constant 4 : i32
    %102 = arith.muli %101, %c4_i32_36 : i32
    %103 = arith.index_cast %102 : i32 to index
    %104 = memref.load %arg1[%103] : memref<64xi32, #tpu.memory_space<smem>>
    %105 = arith.index_cast %104 : i32 to index
    %c0_37 = arith.constant 0 : index
    %106 = vector.load %arg2[%105, %c0_37] : memref<1000x64xf32, #tpu.memory_space<vmem>>, vector<1x64xf32>
    %c1_i32_38 = arith.constant 1 : i32
    %107 = arith.addi %102, %c1_i32_38 : i32
    %108 = arith.index_cast %107 : i32 to index
    %109 = memref.load %arg1[%108] : memref<64xi32, #tpu.memory_space<smem>>
    %110 = arith.index_cast %109 : i32 to index
    %c0_39 = arith.constant 0 : index
    %111 = vector.load %arg2[%110, %c0_39] : memref<1000x64xf32, #tpu.memory_space<vmem>>, vector<1x64xf32>
    %112 = arith.addf %106, %111 : vector<1x64xf32>
    %c2_i32_40 = arith.constant 2 : i32
    %113 = arith.addi %102, %c2_i32_40 : i32
    %114 = arith.index_cast %113 : i32 to index
    %115 = memref.load %arg1[%114] : memref<64xi32, #tpu.memory_space<smem>>
    %116 = arith.index_cast %115 : i32 to index
    %c0_41 = arith.constant 0 : index
    %117 = vector.load %arg2[%116, %c0_41] : memref<1000x64xf32, #tpu.memory_space<vmem>>, vector<1x64xf32>
    %118 = arith.addf %112, %117 : vector<1x64xf32>
    %c3_i32_42 = arith.constant 3 : i32
    %119 = arith.addi %102, %c3_i32_42 : i32
    %120 = arith.index_cast %119 : i32 to index
    %121 = memref.load %arg1[%120] : memref<64xi32, #tpu.memory_space<smem>>
    %122 = arith.index_cast %121 : i32 to index
    %c0_43 = arith.constant 0 : index
    %123 = vector.load %arg2[%122, %c0_43] : memref<1000x64xf32, #tpu.memory_space<vmem>>, vector<1x64xf32>
    %124 = arith.addf %118, %123 : vector<1x64xf32>
    %c4 = arith.constant 4 : index
    %c0_44 = arith.constant 0 : index
    %125 = vector.load %arg5[%c4, %c0_44] : memref<16x64xf32, #tpu.memory_space<vmem>>, vector<1x64xf32>
    tpu.vector_store %arg5[%c4, %c0_44], %124 {strides = array<i32>} : memref<16x64xf32, #tpu.memory_space<vmem>>, vector<1x64xf32>,
    %c5_i32 = arith.constant 5 : i32
    %126 = arith.addi %0, %c5_i32 : i32
    %c4_i32_45 = arith.constant 4 : i32
    %127 = arith.muli %126, %c4_i32_45 : i32
    %128 = arith.index_cast %127 : i32 to index
    %129 = memref.load %arg1[%128] : memref<64xi32, #tpu.memory_space<smem>>
    %130 = arith.index_cast %129 : i32 to index
    %c0_46 = arith.constant 0 : index
    %131 = vector.load %arg2[%130, %c0_46] : memref<1000x64xf32, #tpu.memory_space<vmem>>, vector<1x64xf32>
    %c1_i32_47 = arith.constant 1 : i32
    %132 = arith.addi %127, %c1_i32_47 : i32
    %133 = arith.index_cast %132 : i32 to index
    %134 = memref.load %arg1[%133] : memref<64xi32, #tpu.memory_space<smem>>
    %135 = arith.index_cast %134 : i32 to index
    %c0_48 = arith.constant 0 : index
    %136 = vector.load %arg2[%135, %c0_48] : memref<1000x64xf32, #tpu.memory_space<vmem>>, vector<1x64xf32>
    %137 = arith.addf %131, %136 : vector<1x64xf32>
    %c2_i32_49 = arith.constant 2 : i32
    %138 = arith.addi %127, %c2_i32_49 : i32
    %139 = arith.index_cast %138 : i32 to index
    %140 = memref.load %arg1[%139] : memref<64xi32, #tpu.memory_space<smem>>
    %141 = arith.index_cast %140 : i32 to index
    %c0_50 = arith.constant 0 : index
    %142 = vector.load %arg2[%141, %c0_50] : memref<1000x64xf32, #tpu.memory_space<vmem>>, vector<1x64xf32>
    %143 = arith.addf %137, %142 : vector<1x64xf32>
    %c3_i32_51 = arith.constant 3 : i32
    %144 = arith.addi %127, %c3_i32_51 : i32
    %145 = arith.index_cast %144 : i32 to index
    %146 = memref.load %arg1[%145] : memref<64xi32, #tpu.memory_space<smem>>
    %147 = arith.index_cast %146 : i32 to index
    %c0_52 = arith.constant 0 : index
    %148 = vector.load %arg2[%147, %c0_52] : memref<1000x64xf32, #tpu.memory_space<vmem>>, vector<1x64xf32>
    %149 = arith.addf %143, %148 : vector<1x64xf32>
    %c5 = arith.constant 5 : index
    %c0_53 = arith.constant 0 : index
    %150 = vector.load %arg5[%c5, %c0_53] : memref<16x64xf32, #tpu.memory_space<vmem>>, vector<1x64xf32>
    tpu.vector_store %arg5[%c5, %c0_53], %149 {strides = array<i32>} : memref<16x64xf32, #tpu.memory_space<vmem>>, vector<1x64xf32>,
    %c6_i32 = arith.constant 6 : i32
    %151 = arith.addi %0, %c6_i32 : i32
    %c4_i32_54 = arith.constant 4 : i32
    %152 = arith.muli %151, %c4_i32_54 : i32
    %153 = arith.index_cast %152 : i32 to index
    %154 = memref.load %arg1[%153] : memref<64xi32, #tpu.memory_space<smem>>
    %155 = arith.index_cast %154 : i32 to index
    %c0_55 = arith.constant 0 : index
    %156 = vector.load %arg2[%155, %c0_55] : memref<1000x64xf32, #tpu.memory_space<vmem>>, vector<1x64xf32>
    %c1_i32_56 = arith.constant 1 : i32
    %157 = arith.addi %152, %c1_i32_56 : i32
    %158 = arith.index_cast %157 : i32 to index
    %159 = memref.load %arg1[%158] : memref<64xi32, #tpu.memory_space<smem>>
    %160 = arith.index_cast %159 : i32 to index
    %c0_57 = arith.constant 0 : index
    %161 = vector.load %arg2[%160, %c0_57] : memref<1000x64xf32, #tpu.memory_space<vmem>>, vector<1x64xf32>
    %162 = arith.addf %156, %161 : vector<1x64xf32>
    %c2_i32_58 = arith.constant 2 : i32
    %163 = arith.addi %152, %c2_i32_58 : i32
    %164 = arith.index_cast %163 : i32 to index
    %165 = memref.load %arg1[%164] : memref<64xi32, #tpu.memory_space<smem>>
    %166 = arith.index_cast %165 : i32 to index
    %c0_59 = arith.constant 0 : index
    %167 = vector.load %arg2[%166, %c0_59] : memref<1000x64xf32, #tpu.memory_space<vmem>>, vector<1x64xf32>
    %168 = arith.addf %162, %167 : vector<1x64xf32>
    %c3_i32_60 = arith.constant 3 : i32
    %169 = arith.addi %152, %c3_i32_60 : i32
    %170 = arith.index_cast %169 : i32 to index
    %171 = memref.load %arg1[%170] : memref<64xi32, #tpu.memory_space<smem>>
    %172 = arith.index_cast %171 : i32 to index
    %c0_61 = arith.constant 0 : index
    %173 = vector.load %arg2[%172, %c0_61] : memref<1000x64xf32, #tpu.memory_space<vmem>>, vector<1x64xf32>
    %174 = arith.addf %168, %173 : vector<1x64xf32>
    %c6 = arith.constant 6 : index
    %c0_62 = arith.constant 0 : index
    %175 = vector.load %arg5[%c6, %c0_62] : memref<16x64xf32, #tpu.memory_space<vmem>>, vector<1x64xf32>
    tpu.vector_store %arg5[%c6, %c0_62], %174 {strides = array<i32>} : memref<16x64xf32, #tpu.memory_space<vmem>>, vector<1x64xf32>,
    %c7_i32 = arith.constant 7 : i32
    %176 = arith.addi %0, %c7_i32 : i32
    %c4_i32_63 = arith.constant 4 : i32
    %177 = arith.muli %176, %c4_i32_63 : i32
    %178 = arith.index_cast %177 : i32 to index
    %179 = memref.load %arg1[%178] : memref<64xi32, #tpu.memory_space<smem>>
    %180 = arith.index_cast %179 : i32 to index
    %c0_64 = arith.constant 0 : index
    %181 = vector.load %arg2[%180, %c0_64] : memref<1000x64xf32, #tpu.memory_space<vmem>>, vector<1x64xf32>
    %c1_i32_65 = arith.constant 1 : i32
    %182 = arith.addi %177, %c1_i32_65 : i32
    %183 = arith.index_cast %182 : i32 to index
    %184 = memref.load %arg1[%183] : memref<64xi32, #tpu.memory_space<smem>>
    %185 = arith.index_cast %184 : i32 to index
    %c0_66 = arith.constant 0 : index
    %186 = vector.load %arg2[%185, %c0_66] : memref<1000x64xf32, #tpu.memory_space<vmem>>, vector<1x64xf32>
    %187 = arith.addf %181, %186 : vector<1x64xf32>
    %c2_i32_67 = arith.constant 2 : i32
    %188 = arith.addi %177, %c2_i32_67 : i32
    %189 = arith.index_cast %188 : i32 to index
    %190 = memref.load %arg1[%189] : memref<64xi32, #tpu.memory_space<smem>>
    %191 = arith.index_cast %190 : i32 to index
    %c0_68 = arith.constant 0 : index
    %192 = vector.load %arg2[%191, %c0_68] : memref<1000x64xf32, #tpu.memory_space<vmem>>, vector<1x64xf32>
    %193 = arith.addf %187, %192 : vector<1x64xf32>
    %c3_i32_69 = arith.constant 3 : i32
    %194 = arith.addi %177, %c3_i32_69 : i32
    %195 = arith.index_cast %194 : i32 to index
    %196 = memref.load %arg1[%195] : memref<64xi32, #tpu.memory_space<smem>>
    %197 = arith.index_cast %196 : i32 to index
    %c0_70 = arith.constant 0 : index
    %198 = vector.load %arg2[%197, %c0_70] : memref<1000x64xf32, #tpu.memory_space<vmem>>, vector<1x64xf32>
    %199 = arith.addf %193, %198 : vector<1x64xf32>
    %c7 = arith.constant 7 : index
    %c0_71 = arith.constant 0 : index
    %200 = vector.load %arg5[%c7, %c0_71] : memref<16x64xf32, #tpu.memory_space<vmem>>, vector<1x64xf32>
    tpu.vector_store %arg5[%c7, %c0_71], %199 {strides = array<i32>} : memref<16x64xf32, #tpu.memory_space<vmem>>, vector<1x64xf32>,
    %c8_i32 = arith.constant 8 : i32
    %201 = arith.addi %0, %c8_i32 : i32
    %c4_i32_72 = arith.constant 4 : i32
    %202 = arith.muli %201, %c4_i32_72 : i32
    %203 = arith.index_cast %202 : i32 to index
    %204 = memref.load %arg1[%203] : memref<64xi32, #tpu.memory_space<smem>>
    %205 = arith.index_cast %204 : i32 to index
    %c0_73 = arith.constant 0 : index
    %206 = vector.load %arg2[%205, %c0_73] : memref<1000x64xf32, #tpu.memory_space<vmem>>, vector<1x64xf32>
    %c1_i32_74 = arith.constant 1 : i32
    %207 = arith.addi %202, %c1_i32_74 : i32
    %208 = arith.index_cast %207 : i32 to index
    %209 = memref.load %arg1[%208] : memref<64xi32, #tpu.memory_space<smem>>
    %210 = arith.index_cast %209 : i32 to index
    %c0_75 = arith.constant 0 : index
    %211 = vector.load %arg2[%210, %c0_75] : memref<1000x64xf32, #tpu.memory_space<vmem>>, vector<1x64xf32>
    %212 = arith.addf %206, %211 : vector<1x64xf32>
    %c2_i32_76 = arith.constant 2 : i32
    %213 = arith.addi %202, %c2_i32_76 : i32
    %214 = arith.index_cast %213 : i32 to index
    %215 = memref.load %arg1[%214] : memref<64xi32, #tpu.memory_space<smem>>
    %216 = arith.index_cast %215 : i32 to index
    %c0_77 = arith.constant 0 : index
    %217 = vector.load %arg2[%216, %c0_77] : memref<1000x64xf32, #tpu.memory_space<vmem>>, vector<1x64xf32>
    %218 = arith.addf %212, %217 : vector<1x64xf32>
    %c3_i32_78 = arith.constant 3 : i32
    %219 = arith.addi %202, %c3_i32_78 : i32
    %220 = arith.index_cast %219 : i32 to index
    %221 = memref.load %arg1[%220] : memref<64xi32, #tpu.memory_space<smem>>
    %222 = arith.index_cast %221 : i32 to index
    %c0_79 = arith.constant 0 : index
    %223 = vector.load %arg2[%222, %c0_79] : memref<1000x64xf32, #tpu.memory_space<vmem>>, vector<1x64xf32>
    %224 = arith.addf %218, %223 : vector<1x64xf32>
    %c8 = arith.constant 8 : index
    %c0_80 = arith.constant 0 : index
    %225 = vector.load %arg5[%c8, %c0_80] : memref<16x64xf32, #tpu.memory_space<vmem>>, vector<1x64xf32>
    tpu.vector_store %arg5[%c8, %c0_80], %224 {strides = array<i32>} : memref<16x64xf32, #tpu.memory_space<vmem>>, vector<1x64xf32>,
    %c9_i32 = arith.constant 9 : i32
    %226 = arith.addi %0, %c9_i32 : i32
    %c4_i32_81 = arith.constant 4 : i32
    %227 = arith.muli %226, %c4_i32_81 : i32
    %228 = arith.index_cast %227 : i32 to index
    %229 = memref.load %arg1[%228] : memref<64xi32, #tpu.memory_space<smem>>
    %230 = arith.index_cast %229 : i32 to index
    %c0_82 = arith.constant 0 : index
    %231 = vector.load %arg2[%230, %c0_82] : memref<1000x64xf32, #tpu.memory_space<vmem>>, vector<1x64xf32>
    %c1_i32_83 = arith.constant 1 : i32
    %232 = arith.addi %227, %c1_i32_83 : i32
    %233 = arith.index_cast %232 : i32 to index
    %234 = memref.load %arg1[%233] : memref<64xi32, #tpu.memory_space<smem>>
    %235 = arith.index_cast %234 : i32 to index
    %c0_84 = arith.constant 0 : index
    %236 = vector.load %arg2[%235, %c0_84] : memref<1000x64xf32, #tpu.memory_space<vmem>>, vector<1x64xf32>
    %237 = arith.addf %231, %236 : vector<1x64xf32>
    %c2_i32_85 = arith.constant 2 : i32
    %238 = arith.addi %227, %c2_i32_85 : i32
    %239 = arith.index_cast %238 : i32 to index
    %240 = memref.load %arg1[%239] : memref<64xi32, #tpu.memory_space<smem>>
    %241 = arith.index_cast %240 : i32 to index
    %c0_86 = arith.constant 0 : index
    %242 = vector.load %arg2[%241, %c0_86] : memref<1000x64xf32, #tpu.memory_space<vmem>>, vector<1x64xf32>
    %243 = arith.addf %237, %242 : vector<1x64xf32>
    %c3_i32_87 = arith.constant 3 : i32
    %244 = arith.addi %227, %c3_i32_87 : i32
    %245 = arith.index_cast %244 : i32 to index
    %246 = memref.load %arg1[%245] : memref<64xi32, #tpu.memory_space<smem>>
    %247 = arith.index_cast %246 : i32 to index
    %c0_88 = arith.constant 0 : index
    %248 = vector.load %arg2[%247, %c0_88] : memref<1000x64xf32, #tpu.memory_space<vmem>>, vector<1x64xf32>
    %249 = arith.addf %243, %248 : vector<1x64xf32>
    %c9 = arith.constant 9 : index
    %c0_89 = arith.constant 0 : index
    %250 = vector.load %arg5[%c9, %c0_89] : memref<16x64xf32, #tpu.memory_space<vmem>>, vector<1x64xf32>
    tpu.vector_store %arg5[%c9, %c0_89], %249 {strides = array<i32>} : memref<16x64xf32, #tpu.memory_space<vmem>>, vector<1x64xf32>,
    %c10_i32 = arith.constant 10 : i32
    %251 = arith.addi %0, %c10_i32 : i32
    %c4_i32_90 = arith.constant 4 : i32
    %252 = arith.muli %251, %c4_i32_90 : i32
    %253 = arith.index_cast %252 : i32 to index
    %254 = memref.load %arg1[%253] : memref<64xi32, #tpu.memory_space<smem>>
    %255 = arith.index_cast %254 : i32 to index
    %c0_91 = arith.constant 0 : index
    %256 = vector.load %arg2[%255, %c0_91] : memref<1000x64xf32, #tpu.memory_space<vmem>>, vector<1x64xf32>
    %c1_i32_92 = arith.constant 1 : i32
    %257 = arith.addi %252, %c1_i32_92 : i32
    %258 = arith.index_cast %257 : i32 to index
    %259 = memref.load %arg1[%258] : memref<64xi32, #tpu.memory_space<smem>>
    %260 = arith.index_cast %259 : i32 to index
    %c0_93 = arith.constant 0 : index
    %261 = vector.load %arg2[%260, %c0_93] : memref<1000x64xf32, #tpu.memory_space<vmem>>, vector<1x64xf32>
    %262 = arith.addf %256, %261 : vector<1x64xf32>
    %c2_i32_94 = arith.constant 2 : i32
    %263 = arith.addi %252, %c2_i32_94 : i32
    %264 = arith.index_cast %263 : i32 to index
    %265 = memref.load %arg1[%264] : memref<64xi32, #tpu.memory_space<smem>>
    %266 = arith.index_cast %265 : i32 to index
    %c0_95 = arith.constant 0 : index
    %267 = vector.load %arg2[%266, %c0_95] : memref<1000x64xf32, #tpu.memory_space<vmem>>, vector<1x64xf32>
    %268 = arith.addf %262, %267 : vector<1x64xf32>
    %c3_i32_96 = arith.constant 3 : i32
    %269 = arith.addi %252, %c3_i32_96 : i32
    %270 = arith.index_cast %269 : i32 to index
    %271 = memref.load %arg1[%270] : memref<64xi32, #tpu.memory_space<smem>>
    %272 = arith.index_cast %271 : i32 to index
    %c0_97 = arith.constant 0 : index
    %273 = vector.load %arg2[%272, %c0_97] : memref<1000x64xf32, #tpu.memory_space<vmem>>, vector<1x64xf32>
    %274 = arith.addf %268, %273 : vector<1x64xf32>
    %c10 = arith.constant 10 : index
    %c0_98 = arith.constant 0 : index
    %275 = vector.load %arg5[%c10, %c0_98] : memref<16x64xf32, #tpu.memory_space<vmem>>, vector<1x64xf32>
    tpu.vector_store %arg5[%c10, %c0_98], %274 {strides = array<i32>} : memref<16x64xf32, #tpu.memory_space<vmem>>, vector<1x64xf32>,
    %c11_i32 = arith.constant 11 : i32
    %276 = arith.addi %0, %c11_i32 : i32
    %c4_i32_99 = arith.constant 4 : i32
    %277 = arith.muli %276, %c4_i32_99 : i32
    %278 = arith.index_cast %277 : i32 to index
    %279 = memref.load %arg1[%278] : memref<64xi32, #tpu.memory_space<smem>>
    %280 = arith.index_cast %279 : i32 to index
    %c0_100 = arith.constant 0 : index
    %281 = vector.load %arg2[%280, %c0_100] : memref<1000x64xf32, #tpu.memory_space<vmem>>, vector<1x64xf32>
    %c1_i32_101 = arith.constant 1 : i32
    %282 = arith.addi %277, %c1_i32_101 : i32
    %283 = arith.index_cast %282 : i32 to index
    %284 = memref.load %arg1[%283] : memref<64xi32, #tpu.memory_space<smem>>
    %285 = arith.index_cast %284 : i32 to index
    %c0_102 = arith.constant 0 : index
    %286 = vector.load %arg2[%285, %c0_102] : memref<1000x64xf32, #tpu.memory_space<vmem>>, vector<1x64xf32>
    %287 = arith.addf %281, %286 : vector<1x64xf32>
    %c2_i32_103 = arith.constant 2 : i32
    %288 = arith.addi %277, %c2_i32_103 : i32
    %289 = arith.index_cast %288 : i32 to index
    %290 = memref.load %arg1[%289] : memref<64xi32, #tpu.memory_space<smem>>
    %291 = arith.index_cast %290 : i32 to index
    %c0_104 = arith.constant 0 : index
    %292 = vector.load %arg2[%291, %c0_104] : memref<1000x64xf32, #tpu.memory_space<vmem>>, vector<1x64xf32>
    %293 = arith.addf %287, %292 : vector<1x64xf32>
    %c3_i32_105 = arith.constant 3 : i32
    %294 = arith.addi %277, %c3_i32_105 : i32
    %295 = arith.index_cast %294 : i32 to index
    %296 = memref.load %arg1[%295] : memref<64xi32, #tpu.memory_space<smem>>
    %297 = arith.index_cast %296 : i32 to index
    %c0_106 = arith.constant 0 : index
    %298 = vector.load %arg2[%297, %c0_106] : memref<1000x64xf32, #tpu.memory_space<vmem>>, vector<1x64xf32>
    %299 = arith.addf %293, %298 : vector<1x64xf32>
    %c11 = arith.constant 11 : index
    %c0_107 = arith.constant 0 : index
    %300 = vector.load %arg5[%c11, %c0_107] : memref<16x64xf32, #tpu.memory_space<vmem>>, vector<1x64xf32>
    tpu.vector_store %arg5[%c11, %c0_107], %299 {strides = array<i32>} : memref<16x64xf32, #tpu.memory_space<vmem>>, vector<1x64xf32>,
    %c12_i32 = arith.constant 12 : i32
    %301 = arith.addi %0, %c12_i32 : i32
    %c4_i32_108 = arith.constant 4 : i32
    %302 = arith.muli %301, %c4_i32_108 : i32
    %303 = arith.index_cast %302 : i32 to index
    %304 = memref.load %arg1[%303] : memref<64xi32, #tpu.memory_space<smem>>
    %305 = arith.index_cast %304 : i32 to index
    %c0_109 = arith.constant 0 : index
    %306 = vector.load %arg2[%305, %c0_109] : memref<1000x64xf32, #tpu.memory_space<vmem>>, vector<1x64xf32>
    %c1_i32_110 = arith.constant 1 : i32
    %307 = arith.addi %302, %c1_i32_110 : i32
    %308 = arith.index_cast %307 : i32 to index
    %309 = memref.load %arg1[%308] : memref<64xi32, #tpu.memory_space<smem>>
    %310 = arith.index_cast %309 : i32 to index
    %c0_111 = arith.constant 0 : index
    %311 = vector.load %arg2[%310, %c0_111] : memref<1000x64xf32, #tpu.memory_space<vmem>>, vector<1x64xf32>
    %312 = arith.addf %306, %311 : vector<1x64xf32>
    %c2_i32_112 = arith.constant 2 : i32
    %313 = arith.addi %302, %c2_i32_112 : i32
    %314 = arith.index_cast %313 : i32 to index
    %315 = memref.load %arg1[%314] : memref<64xi32, #tpu.memory_space<smem>>
    %316 = arith.index_cast %315 : i32 to index
    %c0_113 = arith.constant 0 : index
    %317 = vector.load %arg2[%316, %c0_113] : memref<1000x64xf32, #tpu.memory_space<vmem>>, vector<1x64xf32>
    %318 = arith.addf %312, %317 : vector<1x64xf32>
    %c3_i32_114 = arith.constant 3 : i32
    %319 = arith.addi %302, %c3_i32_114 : i32
    %320 = arith.index_cast %319 : i32 to index
    %321 = memref.load %arg1[%320] : memref<64xi32, #tpu.memory_space<smem>>
    %322 = arith.index_cast %321 : i32 to index
    %c0_115 = arith.constant 0 : index
    %323 = vector.load %arg2[%322, %c0_115] : memref<1000x64xf32, #tpu.memory_space<vmem>>, vector<1x64xf32>
    %324 = arith.addf %318, %323 : vector<1x64xf32>
    %c12 = arith.constant 12 : index
    %c0_116 = arith.constant 0 : index
    %325 = vector.load %arg5[%c12, %c0_116] : memref<16x64xf32, #tpu.memory_space<vmem>>, vector<1x64xf32>
    tpu.vector_store %arg5[%c12, %c0_116], %324 {strides = array<i32>} : memref<16x64xf32, #tpu.memory_space<vmem>>, vector<1x64xf32>,
    %c13_i32 = arith.constant 13 : i32
    %326 = arith.addi %0, %c13_i32 : i32
    %c4_i32_117 = arith.constant 4 : i32
    %327 = arith.muli %326, %c4_i32_117 : i32
    %328 = arith.index_cast %327 : i32 to index
    %329 = memref.load %arg1[%328] : memref<64xi32, #tpu.memory_space<smem>>
    %330 = arith.index_cast %329 : i32 to index
    %c0_118 = arith.constant 0 : index
    %331 = vector.load %arg2[%330, %c0_118] : memref<1000x64xf32, #tpu.memory_space<vmem>>, vector<1x64xf32>
    %c1_i32_119 = arith.constant 1 : i32
    %332 = arith.addi %327, %c1_i32_119 : i32
    %333 = arith.index_cast %332 : i32 to index
    %334 = memref.load %arg1[%333] : memref<64xi32, #tpu.memory_space<smem>>
    %335 = arith.index_cast %334 : i32 to index
    %c0_120 = arith.constant 0 : index
    %336 = vector.load %arg2[%335, %c0_120] : memref<1000x64xf32, #tpu.memory_space<vmem>>, vector<1x64xf32>
    %337 = arith.addf %331, %336 : vector<1x64xf32>
    %c2_i32_121 = arith.constant 2 : i32
    %338 = arith.addi %327, %c2_i32_121 : i32
    %339 = arith.index_cast %338 : i32 to index
    %340 = memref.load %arg1[%339] : memref<64xi32, #tpu.memory_space<smem>>
    %341 = arith.index_cast %340 : i32 to index
    %c0_122 = arith.constant 0 : index
    %342 = vector.load %arg2[%341, %c0_122] : memref<1000x64xf32, #tpu.memory_space<vmem>>, vector<1x64xf32>
    %343 = arith.addf %337, %342 : vector<1x64xf32>
    %c3_i32_123 = arith.constant 3 : i32
    %344 = arith.addi %327, %c3_i32_123 : i32
    %345 = arith.index_cast %344 : i32 to index
    %346 = memref.load %arg1[%345] : memref<64xi32, #tpu.memory_space<smem>>
    %347 = arith.index_cast %346 : i32 to index
    %c0_124 = arith.constant 0 : index
    %348 = vector.load %arg2[%347, %c0_124] : memref<1000x64xf32, #tpu.memory_space<vmem>>, vector<1x64xf32>
    %349 = arith.addf %343, %348 : vector<1x64xf32>
    %c13 = arith.constant 13 : index
    %c0_125 = arith.constant 0 : index
    %350 = vector.load %arg5[%c13, %c0_125] : memref<16x64xf32, #tpu.memory_space<vmem>>, vector<1x64xf32>
    tpu.vector_store %arg5[%c13, %c0_125], %349 {strides = array<i32>} : memref<16x64xf32, #tpu.memory_space<vmem>>, vector<1x64xf32>,
    %c14_i32 = arith.constant 14 : i32
    %351 = arith.addi %0, %c14_i32 : i32
    %c4_i32_126 = arith.constant 4 : i32
    %352 = arith.muli %351, %c4_i32_126 : i32
    %353 = arith.index_cast %352 : i32 to index
    %354 = memref.load %arg1[%353] : memref<64xi32, #tpu.memory_space<smem>>
    %355 = arith.index_cast %354 : i32 to index
    %c0_127 = arith.constant 0 : index
    %356 = vector.load %arg2[%355, %c0_127] : memref<1000x64xf32, #tpu.memory_space<vmem>>, vector<1x64xf32>
    %c1_i32_128 = arith.constant 1 : i32
    %357 = arith.addi %352, %c1_i32_128 : i32
    %358 = arith.index_cast %357 : i32 to index
    %359 = memref.load %arg1[%358] : memref<64xi32, #tpu.memory_space<smem>>
    %360 = arith.index_cast %359 : i32 to index
    %c0_129 = arith.constant 0 : index
    %361 = vector.load %arg2[%360, %c0_129] : memref<1000x64xf32, #tpu.memory_space<vmem>>, vector<1x64xf32>
    %362 = arith.addf %356, %361 : vector<1x64xf32>
    %c2_i32_130 = arith.constant 2 : i32
    %363 = arith.addi %352, %c2_i32_130 : i32
    %364 = arith.index_cast %363 : i32 to index
    %365 = memref.load %arg1[%364] : memref<64xi32, #tpu.memory_space<smem>>
    %366 = arith.index_cast %365 : i32 to index
    %c0_131 = arith.constant 0 : index
    %367 = vector.load %arg2[%366, %c0_131] : memref<1000x64xf32, #tpu.memory_space<vmem>>, vector<1x64xf32>
    %368 = arith.addf %362, %367 : vector<1x64xf32>
    %c3_i32_132 = arith.constant 3 : i32
    %369 = arith.addi %352, %c3_i32_132 : i32
    %370 = arith.index_cast %369 : i32 to index
    %371 = memref.load %arg1[%370] : memref<64xi32, #tpu.memory_space<smem>>
    %372 = arith.index_cast %371 : i32 to index
    %c0_133 = arith.constant 0 : index
    %373 = vector.load %arg2[%372, %c0_133] : memref<1000x64xf32, #tpu.memory_space<vmem>>, vector<1x64xf32>
    %374 = arith.addf %368, %373 : vector<1x64xf32>
    %c14 = arith.constant 14 : index
    %c0_134 = arith.constant 0 : index
    %375 = vector.load %arg5[%c14, %c0_134] : memref<16x64xf32, #tpu.memory_space<vmem>>, vector<1x64xf32>
    tpu.vector_store %arg5[%c14, %c0_134], %374 {strides = array<i32>} : memref<16x64xf32, #tpu.memory_space<vmem>>, vector<1x64xf32>,
    %c15_i32 = arith.constant 15 : i32
    %376 = arith.addi %0, %c15_i32 : i32
    %c4_i32_135 = arith.constant 4 : i32
    %377 = arith.muli %376, %c4_i32_135 : i32
    %378 = arith.index_cast %377 : i32 to index
    %379 = memref.load %arg1[%378] : memref<64xi32, #tpu.memory_space<smem>>
    %380 = arith.index_cast %379 : i32 to index
    %c0_136 = arith.constant 0 : index
    %381 = vector.load %arg2[%380, %c0_136] : memref<1000x64xf32, #tpu.memory_space<vmem>>, vector<1x64xf32>
    %c1_i32_137 = arith.constant 1 : i32
    %382 = arith.addi %377, %c1_i32_137 : i32
    %383 = arith.index_cast %382 : i32 to index
    %384 = memref.load %arg1[%383] : memref<64xi32, #tpu.memory_space<smem>>
    %385 = arith.index_cast %384 : i32 to index
    %c0_138 = arith.constant 0 : index
    %386 = vector.load %arg2[%385, %c0_138] : memref<1000x64xf32, #tpu.memory_space<vmem>>, vector<1x64xf32>
    %387 = arith.addf %381, %386 : vector<1x64xf32>
    %c2_i32_139 = arith.constant 2 : i32
    %388 = arith.addi %377, %c2_i32_139 : i32
    %389 = arith.index_cast %388 : i32 to index
    %390 = memref.load %arg1[%389] : memref<64xi32, #tpu.memory_space<smem>>
    %391 = arith.index_cast %390 : i32 to index
    %c0_140 = arith.constant 0 : index
    %392 = vector.load %arg2[%391, %c0_140] : memref<1000x64xf32, #tpu.memory_space<vmem>>, vector<1x64xf32>
    %393 = arith.addf %387, %392 : vector<1x64xf32>
    %c3_i32_141 = arith.constant 3 : i32
    %394 = arith.addi %377, %c3_i32_141 : i32
    %395 = arith.index_cast %394 : i32 to index
    %396 = memref.load %arg1[%395] : memref<64xi32, #tpu.memory_space<smem>>
    %397 = arith.index_cast %396 : i32 to index
    %c0_142 = arith.constant 0 : index
    %398 = vector.load %arg2[%397, %c0_142] : memref<1000x64xf32, #tpu.memory_space<vmem>>, vector<1x64xf32>
    %399 = arith.addf %393, %398 : vector<1x64xf32>
    %c15 = arith.constant 15 : index
    %c0_143 = arith.constant 0 : index
    %400 = vector.load %arg5[%c15, %c0_143] : memref<16x64xf32, #tpu.memory_space<vmem>>, vector<1x64xf32>
    tpu.vector_store %arg5[%c15, %c0_143], %399 {strides = array<i32>} : memref<16x64xf32, #tpu.memory_space<vmem>>, vector<1x64xf32>,
    %c0_144 = arith.constant 0 : index
    %c0_145 = arith.constant 0 : index
    %401 = vector.load %arg5[%c0_144, %c0_145] : memref<16x64xf32, #tpu.memory_space<vmem>>, vector<16x64xf32>
    %402 = arith.truncf %401 : vector<16x64xf32> to vector<16x64xbf16>
    %c0_146 = arith.constant 0 : index
    %c0_147 = arith.constant 0 : index
    %403 = vector.load %arg3[%c0_146, %c0_147] : memref<64x128xbf16, #tpu.memory_space<vmem>>, vector<64x128xbf16>
    %cst = arith.constant dense<0.000000e+00> : vector<16x128xf32>
    %404 = tpu.matmul %402, %403, %cst {dimension_numbers = #tpu.dot_dimension_numbers<[1], [0], [0], [1], [0, 0, 1, 1], [], []>} : vector<16x64xbf16>, vector<64x128xbf16>, vector<16x128xf32> -> vector<16x128xf32>
    %c0_148 = arith.constant 0 : index
    %c0_149 = arith.constant 0 : index
    %405 = vector.load %arg4[%c0_148, %c0_149] : memref<16x128xf32, #tpu.memory_space<vmem>>, vector<16x128xf32>
    tpu.vector_store %arg4[%c0_148, %c0_149], %404 {strides = array<i32>} : memref<16x128xf32, #tpu.memory_space<vmem>>, vector<16x128xf32>,
    return
  }
  func.func @transform_0(%arg0: i32, %arg1: memref<64xi32, #tpu.memory_space<smem>>) -> (i32, i32) {
    %c0_i32 = arith.constant 0 : i32
    %c0_i32_0 = arith.constant 0 : i32
    %c0_i32_1 = arith.constant 0 : i32
    return %c0_i32, %c0_i32_0 : i32, i32
  }
  func.func @transform_1(%arg0: i32, %arg1: memref<64xi32, #tpu.memory_space<smem>>) -> (i32, i32) {
    %c0_i32 = arith.constant 0 : i32
    %c0_i32_0 = arith.constant 0 : i32
    %c0_i32_1 = arith.constant 0 : i32
    return %c0_i32, %c0_i32_0 : i32, i32
  }
  func.func @transform_2(%arg0: i32, %arg1: memref<64xi32, #tpu.memory_space<smem>>) -> (i32, i32) {
    %c0_i32 = arith.constant 0 : i32
    %c0_i32_0 = arith.constant 0 : i32
    return %arg0, %c0_i32 : i32, i32
  }
}

</mosaic_0001>

<llo_original>
// kernel: embedding_linear_forward.1
$region0: #{embedding_linear_forward.1}
  #allocation0 [shape = 'u32[]', space=smem, size = 0x4, offset = 0x4, fixed_abs, tag = 'smem constant byte address 0x4 - core index']
  #allocation1 [shape = 'u32[144,128]{1,0:T(1,128)}', space=vmem, size = 0x12000, scoped, tag = 'internal scratch']
  #allocation2 [shape = 'f32[16,64]{1,0:T(8,128)}', space=vmem, size = 0x2000, scoped, tag = 'scratch operand']
  #allocation3 [shape = 's32[1]{0}', space=sflag, size = 0x4, scoped, tag = 'scoped memory for embedding_linear_forward.1']
  #allocation4 [shape = 'u8[512]{0}', space=smem, size = 0x200, scoped, tag = 'prefetched SMEM operand 0']
  %s0 = inlined_call_operand.vmem [shape: s32[64], index: 0, kind: input, shape index: {}]
  %s1 = inlined_call_operand.vmem [shape: f32[1000,64], index: 1, kind: input, shape index: {}]
  %s2 = inlined_call_operand.vmem [shape: bf16[64,128], index: 2, kind: input, shape index: {}]
  %s3 = inlined_call_operand.hbm [shape: f32[16,128], index: 3, kind: output, shape index: {}]
  %s4 = sld [smem:[#allocation0]]
  $region18: #{embedding_linear_forward.1} parent=0
    _
  %s6 = ssub.s32 1, %s4
  %s7 = scalar_select 0, %s6, %s4
  %s8 = sshll.u32 %s0, 4
  %s9 = int_to_ptr.vmem [resolvable:$true] %s8
  %11 = dma.vmem_to_smem %s9, 16, [#allocation4], [#allocation3]
  %12 = dma.done [#allocation3], 16
  %13 = sfence
  $region1: #{embedding_linear_forward.1} parent=0
    #allocation5 [shape = 'u8[8192]{0}', space=vmem, size = 0x2000, scoped, tag = 'output window, operand 0, single buffered']
    #allocation6 [shape = 's32[1]{0}', space=sflag, size = 0x4, scoped, tag = 'scoped memory for embedding_linear_forward.1']
    %14 = vsyncpa [#allocation6], 0
    // Predicated region
    $region2: #{embedding_linear_forward.1} parent=1 // pred_check
      _
    $region3: #{embedding_linear_forward.1} parent=1 // pred_check_branch
      %16 = sbr.rel (0) target = $region5
    $region4: #{embedding_linear_forward.1} parent=1 // pred_region
      _
    $region5: #{embedding_linear_forward.1} parent=1 // pred_fallthru
      _
    // Predicated region
    $region6: #{embedding_linear_forward.1} parent=1 // pred_check
      _
    $region7: #{embedding_linear_forward.1} parent=1 // pred_check_branch
      %18 = sbr.rel (0) target = $region9
    $region8: #{embedding_linear_forward.1} parent=1 // pred_region
      _
    $region9: #{embedding_linear_forward.1} parent=1 // pred_fallthru
      _
    %s20 = smul.u32 0, 16
    %s21 = smul.u32 0, 64
    %s22 = sld [smem:[#allocation4 + %s21]]
    %s23 = scalar_lea.vmem %s1, %s22
    %v24 = vld [vmem:[%s23] sm:$0x1]
    %s25 = sadd.s32 %s21, 1
    %s26 = sld [smem:[#allocation4 + %s25]]
    %s27 = scalar_lea.vmem %s1, %s26
    %v28 = vld [vmem:[%s27] sm:$0x1]
    %v29 = vadd.f32 %v24, %v28
    %s30 = sadd.s32 %s21, 2
    %s31 = sld [smem:[#allocation4 + %s30]]
    %s32 = scalar_lea.vmem %s1, %s31
    %v33 = vld [vmem:[%s32] sm:$0x1]
    %v34 = vadd.f32 %v29, %v33
    %s35 = sadd.s32 %s21, 3
    %s36 = sld [smem:[#allocation4 + %s35]]
    %s37 = scalar_lea.vmem %s1, %s36
    %v38 = vld [vmem:[%s37] sm:$0x1]
    %v39 = vadd.f32 %v34, %v38
    %vm40 = vcmask 516096
    %41 = vst.msk [vmem:[#allocation2] sm:$0x1] %vm40, %v39
    %s42 = sadd.s32 %s20, 1
    %s43 = smul.u32 %s42, 4
    %s44 = sld [smem:[#allocation4 + %s43]]
    %s45 = scalar_lea.vmem %s1, %s44
    %v46 = vld [vmem:[%s45] sm:$0x1]
    %s47 = sadd.s32 %s43, 1
    %s48 = sld [smem:[#allocation4 + %s47]]
    %s49 = scalar_lea.vmem %s1, %s48
    %v50 = vld [vmem:[%s49] sm:$0x1]
    %v51 = vadd.f32 %v46, %v50
    %s52 = sadd.s32 %s43, 2
    %s53 = sld [smem:[#allocation4 + %s52]]
    %s54 = scalar_lea.vmem %s1, %s53
    %v55 = vld [vmem:[%s54] sm:$0x1]
    %v56 = vadd.f32 %v51, %v55
    %s57 = sadd.s32 %s43, 3
    %s58 = sld [smem:[#allocation4 + %s57]]
    %s59 = scalar_lea.vmem %s1, %s58
    %v60 = vld [vmem:[%s59] sm:$0x1]
    %v61 = vadd.f32 %v56, %v60
    %62 = vst.msk [vmem:[#allocation2 + $0x1] sm:$0x1] %vm40, %v61
    %s63 = sadd.s32 %s20, 2
    %s64 = smul.u32 %s63, 4
    %s65 = sld [smem:[#allocation4 + %s64]]
    %s66 = scalar_lea.vmem %s1, %s65
    %v67 = vld [vmem:[%s66] sm:$0x1]
    %s68 = sadd.s32 %s64, 1
    %s69 = sld [smem:[#allocation4 + %s68]]
    %s70 = scalar_lea.vmem %s1, %s69
    %v71 = vld [vmem:[%s70] sm:$0x1]
    %v72 = vadd.f32 %v67, %v71
    %s73 = sadd.s32 %s64, 2
    %s74 = sld [smem:[#allocation4 + %s73]]
    %s75 = scalar_lea.vmem %s1, %s74
    %v76 = vld [vmem:[%s75] sm:$0x1]
    %v77 = vadd.f32 %v72, %v76
    %s78 = sadd.s32 %s64, 3
    %s79 = sld [smem:[#allocation4 + %s78]]
    %s80 = scalar_lea.vmem %s1, %s79
    %v81 = vld [vmem:[%s80] sm:$0x1]
    %v82 = vadd.f32 %v77, %v81
    %83 = vst.msk [vmem:[#allocation2 + $0x2] sm:$0x1] %vm40, %v82
    %s84 = sadd.s32 %s20, 3
    %s85 = smul.u32 %s84, 4
    %s86 = sld [smem:[#allocation4 + %s85]]
    %s87 = scalar_lea.vmem %s1, %s86
    %v88 = vld [vmem:[%s87] sm:$0x1]
    %s89 = sadd.s32 %s85, 1
    %s90 = sld [smem:[#allocation4 + %s89]]
    %s91 = scalar_lea.vmem %s1, %s90
    %v92 = vld [vmem:[%s91] sm:$0x1]
    %v93 = vadd.f32 %v88, %v92
    %s94 = sadd.s32 %s85, 2
    %s95 = sld [smem:[#allocation4 + %s94]]
    %s96 = scalar_lea.vmem %s1, %s95
    %v97 = vld [vmem:[%s96] sm:$0x1]
    %v98 = vadd.f32 %v93, %v97
    %s99 = sadd.s32 %s85, 3
    %s100 = sld [smem:[#allocation4 + %s99]]
    %s101 = scalar_lea.vmem %s1, %s100
    %v102 = vld [vmem:[%s101] sm:$0x1]
    %v103 = vadd.f32 %v98, %v102
    %104 = vst.msk [vmem:[#allocation2 + $0x3] sm:$0x1] %vm40, %v103
    %s105 = sadd.s32 %s20, 4
    %s106 = smul.u32 %s105, 4
    %s107 = sld [smem:[#allocation4 + %s106]]
    %s108 = scalar_lea.vmem %s1, %s107
    %v109 = vld [vmem:[%s108] sm:$0x1]
    %s110 = sadd.s32 %s106, 1
    %s111 = sld [smem:[#allocation4 + %s110]]
    %s112 = scalar_lea.vmem %s1, %s111
    %v113 = vld [vmem:[%s112] sm:$0x1]
    %v114 = vadd.f32 %v109, %v113
    %s115 = sadd.s32 %s106, 2
    %s116 = sld [smem:[#allocation4 + %s115]]
    %s117 = scalar_lea.vmem %s1, %s116
    %v118 = vld [vmem:[%s117] sm:$0x1]
    %v119 = vadd.f32 %v114, %v118
    %s120 = sadd.s32 %s106, 3
    %s121 = sld [smem:[#allocation4 + %s120]]
    %s122 = scalar_lea.vmem %s1, %s121
    %v123 = vld [vmem:[%s122] sm:$0x1]
    %v124 = vadd.f32 %v119, %v123
    %125 = vst.msk [vmem:[#allocation2 + $0x4] sm:$0x1] %vm40, %v124
    %s126 = sadd.s32 %s20, 5
    %s127 = smul.u32 %s126, 4
    %s128 = sld [smem:[#allocation4 + %s127]]
    %s129 = scalar_lea.vmem %s1, %s128
    %v130 = vld [vmem:[%s129] sm:$0x1]
    %s131 = sadd.s32 %s127, 1
    %s132 = sld [smem:[#allocation4 + %s131]]
    %s133 = scalar_lea.vmem %s1, %s132
    %v134 = vld [vmem:[%s133] sm:$0x1]
    %v135 = vadd.f32 %v130, %v134
    %s136 = sadd.s32 %s127, 2
    %s137 = sld [smem:[#allocation4 + %s136]]
    %s138 = scalar_lea.vmem %s1, %s137
    %v139 = vld [vmem:[%s138] sm:$0x1]
    %v140 = vadd.f32 %v135, %v139
    %s141 = sadd.s32 %s127, 3
    %s142 = sld [smem:[#allocation4 + %s141]]
    %s143 = scalar_lea.vmem %s1, %s142
    %v144 = vld [vmem:[%s143] sm:$0x1]
    %v145 = vadd.f32 %v140, %v144
    %146 = vst.msk [vmem:[#allocation2 + $0x5] sm:$0x1] %vm40, %v145
    %s147 = sadd.s32 %s20, 6
    %s148 = smul.u32 %s147, 4
    %s149 = sld [smem:[#allocation4 + %s148]]
    %s150 = scalar_lea.vmem %s1, %s149
    %v151 = vld [vmem:[%s150] sm:$0x1]
    %s152 = sadd.s32 %s148, 1
    %s153 = sld [smem:[#allocation4 + %s152]]
    %s154 = scalar_lea.vmem %s1, %s153
    %v155 = vld [vmem:[%s154] sm:$0x1]
    %v156 = vadd.f32 %v151, %v155
    %s157 = sadd.s32 %s148, 2
    %s158 = sld [smem:[#allocation4 + %s157]]
    %s159 = scalar_lea.vmem %s1, %s158
    %v160 = vld [vmem:[%s159] sm:$0x1]
    %v161 = vadd.f32 %v156, %v160
    %s162 = sadd.s32 %s148, 3
    %s163 = sld [smem:[#allocation4 + %s162]]
    %s164 = scalar_lea.vmem %s1, %s163
    %v165 = vld [vmem:[%s164] sm:$0x1]
    %v166 = vadd.f32 %v161, %v165
    %167 = vst.msk [vmem:[#allocation2 + $0x6] sm:$0x1] %vm40, %v166
    %s168 = sadd.s32 %s20, 7
    %s169 = smul.u32 %s168, 4
    %s170 = sld [smem:[#allocation4 + %s169]]
    %s171 = scalar_lea.vmem %s1, %s170
    %v172 = vld [vmem:[%s171] sm:$0x1]
    %s173 = sadd.s32 %s169, 1
    %s174 = sld [smem:[#allocation4 + %s173]]
    %s175 = scalar_lea.vmem %s1, %s174
    %v176 = vld [vmem:[%s175] sm:$0x1]
    %v177 = vadd.f32 %v172, %v176
    %s178 = sadd.s32 %s169, 2
    %s179 = sld [smem:[#allocation4 + %s178]]
    %s180 = scalar_lea.vmem %s1, %s179
    %v181 = vld [vmem:[%s180] sm:$0x1]
    %v182 = vadd.f32 %v177, %v181
    %s183 = sadd.s32 %s169, 3
    %s184 = sld [smem:[#allocation4 + %s183]]
    %s185 = scalar_lea.vmem %s1, %s184
    %v186 = vld [vmem:[%s185] sm:$0x1]
    %v187 = vadd.f32 %v182, %v186
    %188 = vst.msk [vmem:[#allocation2 + $0x7] sm:$0x1] %vm40, %v187
    %s189 = sadd.s32 %s20, 8
    %s190 = smul.u32 %s189, 4
    %s191 = sld [smem:[#allocation4 + %s190]]
    %s192 = scalar_lea.vmem %s1, %s191
    %v193 = vld [vmem:[%s192] sm:$0x1]
    %s194 = sadd.s32 %s190, 1
    %s195 = sld [smem:[#allocation4 + %s194]]
    %s196 = scalar_lea.vmem %s1, %s195
    %v197 = vld [vmem:[%s196] sm:$0x1]
    %v198 = vadd.f32 %v193, %v197
    %s199 = sadd.s32 %s190, 2
    %s200 = sld [smem:[#allocation4 + %s199]]
    %s201 = scalar_lea.vmem %s1, %s200
    %v202 = vld [vmem:[%s201] sm:$0x1]
    %v203 = vadd.f32 %v198, %v202
    %s204 = sadd.s32 %s190, 3
    %s205 = sld [smem:[#allocation4 + %s204]]
    %s206 = scalar_lea.vmem %s1, %s205
    %v207 = vld [vmem:[%s206] sm:$0x1]
    %v208 = vadd.f32 %v203, %v207
    %209 = vst.msk [vmem:[#allocation2 + $0x8] sm:$0x1] %vm40, %v208
    %s210 = sadd.s32 %s20, 9
    %s211 = smul.u32 %s210, 4
    %s212 = sld [smem:[#allocation4 + %s211]]
    %s213 = scalar_lea.vmem %s1, %s212
    %v214 = vld [vmem:[%s213] sm:$0x1]
    %s215 = sadd.s32 %s211, 1
    %s216 = sld [smem:[#allocation4 + %s215]]
    %s217 = scalar_lea.vmem %s1, %s216
    %v218 = vld [vmem:[%s217] sm:$0x1]
    %v219 = vadd.f32 %v214, %v218
    %s220 = sadd.s32 %s211, 2
    %s221 = sld [smem:[#allocation4 + %s220]]
    %s222 = scalar_lea.vmem %s1, %s221
    %v223 = vld [vmem:[%s222] sm:$0x1]
    %v224 = vadd.f32 %v219, %v223
    %s225 = sadd.s32 %s211, 3
    %s226 = sld [smem:[#allocation4 + %s225]]
    %s227 = scalar_lea.vmem %s1, %s226
    %v228 = vld [vmem:[%s227] sm:$0x1]
    %v229 = vadd.f32 %v224, %v228
    %230 = vst.msk [vmem:[#allocation2 + $0x9] sm:$0x1] %vm40, %v229
    %s231 = sadd.s32 %s20, 10
    %s232 = smul.u32 %s231, 4
    %s233 = sld [smem:[#allocation4 + %s232]]
    %s234 = scalar_lea.vmem %s1, %s233
    %v235 = vld [vmem:[%s234] sm:$0x1]
    %s236 = sadd.s32 %s232, 1
    %s237 = sld [smem:[#allocation4 + %s236]]
    %s238 = scalar_lea.vmem %s1, %s237
    %v239 = vld [vmem:[%s238] sm:$0x1]
    %v240 = vadd.f32 %v235, %v239
    %s241 = sadd.s32 %s232, 2
    %s242 = sld [smem:[#allocation4 + %s241]]
    %s243 = scalar_lea.vmem %s1, %s242
    %v244 = vld [vmem:[%s243] sm:$0x1]
    %v245 = vadd.f32 %v240, %v244
    %s246 = sadd.s32 %s232, 3
    %s247 = sld [smem:[#allocation4 + %s246]]
    %s248 = scalar_lea.vmem %s1, %s247
    %v249 = vld [vmem:[%s248] sm:$0x1]
    %v250 = vadd.f32 %v245, %v249
    %251 = vst.msk [vmem:[#allocation2 + $0xa] sm:$0x1] %vm40, %v250
    %s252 = sadd.s32 %s20, 11
    %s253 = smul.u32 %s252, 4
    %s254 = sld [smem:[#allocation4 + %s253]]
    %s255 = scalar_lea.vmem %s1, %s254
    %v256 = vld [vmem:[%s255] sm:$0x1]
    %s257 = sadd.s32 %s253, 1
    %s258 = sld [smem:[#allocation4 + %s257]]
    %s259 = scalar_lea.vmem %s1, %s258
    %v260 = vld [vmem:[%s259] sm:$0x1]
    %v261 = vadd.f32 %v256, %v260
    %s262 = sadd.s32 %s253, 2
    %s263 = sld [smem:[#allocation4 + %s262]]
    %s264 = scalar_lea.vmem %s1, %s263
    %v265 = vld [vmem:[%s264] sm:$0x1]
    %v266 = vadd.f32 %v261, %v265
    %s267 = sadd.s32 %s253, 3
    %s268 = sld [smem:[#allocation4 + %s267]]
    %s269 = scalar_lea.vmem %s1, %s268
    %v270 = vld [vmem:[%s269] sm:$0x1]
    %v271 = vadd.f32 %v266, %v270
    %272 = vst.msk [vmem:[#allocation2 + $0xb] sm:$0x1] %vm40, %v271
    %s273 = sadd.s32 %s20, 12
    %s274 = smul.u32 %s273, 4
    %s275 = sld [smem:[#allocation4 + %s274]]
    %s276 = scalar_lea.vmem %s1, %s275
    %v277 = vld [vmem:[%s276] sm:$0x1]
    %s278 = sadd.s32 %s274, 1
    %s279 = sld [smem:[#allocation4 + %s278]]
    %s280 = scalar_lea.vmem %s1, %s279
    %v281 = vld [vmem:[%s280] sm:$0x1]
    %v282 = vadd.f32 %v277, %v281
    %s283 = sadd.s32 %s274, 2
    %s284 = sld [smem:[#allocation4 + %s283]]
    %s285 = scalar_lea.vmem %s1, %s284
    %v286 = vld [vmem:[%s285] sm:$0x1]
    %v287 = vadd.f32 %v282, %v286
    %s288 = sadd.s32 %s274, 3
    %s289 = sld [smem:[#allocation4 + %s288]]
    %s290 = scalar_lea.vmem %s1, %s289
    %v291 = vld [vmem:[%s290] sm:$0x1]
    %v292 = vadd.f32 %v287, %v291
    %293 = vst.msk [vmem:[#allocation2 + $0xc] sm:$0x1] %vm40, %v292
    %s294 = sadd.s32 %s20, 13
    %s295 = smul.u32 %s294, 4
    %s296 = sld [smem:[#allocation4 + %s295]]
    %s297 = scalar_lea.vmem %s1, %s296
    %v298 = vld [vmem:[%s297] sm:$0x1]
    %s299 = sadd.s32 %s295, 1
    %s300 = sld [smem:[#allocation4 + %s299]]
    %s301 = scalar_lea.vmem %s1, %s300
    %v302 = vld [vmem:[%s301] sm:$0x1]
    %v303 = vadd.f32 %v298, %v302
    %s304 = sadd.s32 %s295, 2
    %s305 = sld [smem:[#allocation4 + %s304]]
    %s306 = scalar_lea.vmem %s1, %s305
    %v307 = vld [vmem:[%s306] sm:$0x1]
    %v308 = vadd.f32 %v303, %v307
    %s309 = sadd.s32 %s295, 3
    %s310 = sld [smem:[#allocation4 + %s309]]
    %s311 = scalar_lea.vmem %s1, %s310
    %v312 = vld [vmem:[%s311] sm:$0x1]
    %v313 = vadd.f32 %v308, %v312
    %314 = vst.msk [vmem:[#allocation2 + $0xd] sm:$0x1] %vm40, %v313
    %s315 = sadd.s32 %s20, 14
    %s316 = smul.u32 %s315, 4
    %s317 = sld [smem:[#allocation4 + %s316]]
    %s318 = scalar_lea.vmem %s1, %s317
    %v319 = vld [vmem:[%s318] sm:$0x1]
    %s320 = sadd.s32 %s316, 1
    %s321 = sld [smem:[#allocation4 + %s320]]
    %s322 = scalar_lea.vmem %s1, %s321
    %v323 = vld [vmem:[%s322] sm:$0x1]
    %v324 = vadd.f32 %v319, %v323
    %s325 = sadd.s32 %s316, 2
    %s326 = sld [smem:[#allocation4 + %s325]]
    %s327 = scalar_lea.vmem %s1, %s326
    %v328 = vld [vmem:[%s327] sm:$0x1]
    %v329 = vadd.f32 %v324, %v328
    %s330 = sadd.s32 %s316, 3
    %s331 = sld [smem:[#allocation4 + %s330]]
    %s332 = scalar_lea.vmem %s1, %s331
    %v333 = vld [vmem:[%s332] sm:$0x1]
    %v334 = vadd.f32 %v329, %v333
    %335 = vst.msk [vmem:[#allocation2 + $0xe] sm:$0x1] %vm40, %v334
    %s336 = sadd.s32 %s20, 15
    %s337 = smul.u32 %s336, 4
    %s338 = sld [smem:[#allocation4 + %s337]]
    %s339 = scalar_lea.vmem %s1, %s338
    %v340 = vld [vmem:[%s339] sm:$0x1]
    %s341 = sadd.s32 %s337, 1
    %s342 = sld [smem:[#allocation4 + %s341]]
    %s343 = scalar_lea.vmem %s1, %s342
    %v344 = vld [vmem:[%s343] sm:$0x1]
    %v345 = vadd.f32 %v340, %v344
    %s346 = sadd.s32 %s337, 2
    %s347 = sld [smem:[#allocation4 + %s346]]
    %s348 = scalar_lea.vmem %s1, %s347
    %v349 = vld [vmem:[%s348] sm:$0x1]
    %v350 = vadd.f32 %v345, %v349
    %s351 = sadd.s32 %s337, 3
    %s352 = sld [smem:[#allocation4 + %s351]]
    %s353 = scalar_lea.vmem %s1, %s352
    %v354 = vld [vmem:[%s353] sm:$0x1]
    %v355 = vadd.f32 %v350, %v354
    %356 = vst.msk [vmem:[#allocation2 + $0xf] sm:$0x1] %vm40, %v355
    %v357 = vld [vmem:[#allocation2] sm:$0xff]
    %v358 = vld [vmem:[#allocation2 + $0x8] sm:$0xff]
    %v359 = vpack.c.bf16 %v358, %v357
    %v360 = vld [vmem:[%s2] sm:$0xf]
    %v361 = vld [vmem:[%s2 + $0x4] sm:$0xf]
    %v362 = vld [vmem:[%s2 + $0x8] sm:$0xf]
    %v363 = vld [vmem:[%s2 + $0xc] sm:$0xf]
    %v364 = vld [vmem:[%s2 + $0x10] sm:$0xf]
    %v365 = vld [vmem:[%s2 + $0x14] sm:$0xf]
    %v366 = vld [vmem:[%s2 + $0x18] sm:$0xf]
    %v367 = vld [vmem:[%s2 + $0x1c] sm:$0xf]
    %v376 = vunpack.c.l.b16 %v360
    %v377 = vunpack.c.l.b16 %v361
    %v378 = vunpack.c.l.b16 %v362
    %v379 = vunpack.c.l.b16 %v363
    %v380 = vunpack.c.l.b16 %v364
    %v381 = vunpack.c.l.b16 %v365
    %v382 = vunpack.c.l.b16 %v366
    %v383 = vunpack.c.l.b16 %v367
    %v384 = vpack.c.b16 %v377, %v376
    %v385 = vpack.c.b16 %v379, %v378
    %v386 = vpack.c.b16 %v381, %v380
    %v387 = vpack.c.b16 %v383, %v382
    %vm392 = vcmask 523264
    %v394 = vsel %vm392, %v359, 0
    %396 = vmatprep.subr.bf16.mxu0 0
    %397 = vmatpush1.bf16.msra.mxu0 0
    %398 = vmatprep.subr.bf16.mxu0 0
    %399 = vmatpush1.bf16.msra.mxu0 0
    %400 = vmatprep.subr.bf16.mxu0 0
    %401 = vmatpush1.bf16.msra.mxu0 0
    %402 = vmatprep.subr.bf16.mxu0 0
    %403 = vmatpush1.bf16.msra.mxu0 0
    %404 = vmatprep.subr.bf16.mxu0 0
    %405 = vmatpush1.bf16.msra.mxu0 %v387
    %406 = vmatprep.subr.bf16.mxu0 0
    %407 = vmatpush1.bf16.msra.mxu0 %v386
    %408 = vmatprep.subr.bf16.mxu0 0
    %409 = vmatpush1.bf16.msra.mxu0 %v385
    %410 = vmatprep.subr.bf16.mxu0 0
    %411 = vmatpush1.bf16.msra.mxu0 %v384
    %412 = vmatprep.subr.bf16.mxu0 0
    %413 = vmatpush2.bf16.msra.mxu0 0
    %414 = vmatprep.subr.bf16.mxu0 0
    %415 = vmatpush2.bf16.msra.mxu0 0
    %416 = vmatprep.subr.bf16.mxu0 0
    %417 = vmatpush2.bf16.msra.mxu0 0
    %418 = vmatprep.subr.bf16.mxu0 0
    %419 = vmatpush2.bf16.msra.mxu0 0
    %420 = vmatprep.subr.bf16.mxu0 0
    %421 = vmatpush2.bf16.msra.mxu0 0
    %422 = vmatprep.subr.bf16.mxu0 0
    %423 = vmatpush2.bf16.msra.mxu0 0
    %424 = vmatprep.subr.bf16.mxu0 0
    %425 = vmatpush2.bf16.msra.mxu0 0
    %426 = vmatprep.subr.bf16.mxu0 0
    %427 = vmatpush2.bf16.msra.mxu0 0
    %428 = vmatprep.mubr.bf16.mxu0 0
    %429 = vmatmul.mubr.bf16.gmra.mxu0 %v394
    %v430 = vpop.f32.mrf.mxu0
    %v431 = vadd.f32 0.0, %v430
    %v432 = vpop.f32.mrf.mxu0
    %v433 = vpop.f32.mrf.mxu0
    %v434 = vadd.f32 0.0, %v433
    %v435 = vpop.f32.mrf.mxu0
    %436 = vdwg.mxu0
    %437 = vst [vmem:[#allocation5] sm:$0xff] %v431
    %438 = vst [vmem:[#allocation5 + $0x8] sm:$0xff] %v434
    // Predicated region
    $region10: #{embedding_linear_forward.1} parent=1 // pred_check
      _
    $region11: #{embedding_linear_forward.1} parent=1 // pred_check_branch
      %440 = sbr.rel (0) target = $region13
    $region12: #{embedding_linear_forward.1} parent=1 // pred_region
      %s442 = ssub.s32 256, 256
      %443 = vsyncadd [#allocation6], %s442
      %s444 = sshll.u32 [#allocation5], 4
      %s445 = int_to_ptr.vmem [resolvable:$true] %s444
      %450 = dma.vmem_to_hbm [thread:$0]  %s445, 256, %s3, [#allocation6], 128, 128, 8
    $region13: #{embedding_linear_forward.1} parent=1 // pred_fallthru
      _
    // Predicated region
    $region14: #{embedding_linear_forward.1} parent=1 // pred_check
      _
    $region15: #{embedding_linear_forward.1} parent=1 // pred_check_branch
      %452 = sbr.rel (0) target = $region17
    $region16: #{embedding_linear_forward.1} parent=1 // pred_region
      %453 = dma.done [#allocation6], 256
    $region17: #{embedding_linear_forward.1} parent=1 // pred_fallthru
      _
    %454 = vsyncpa [#allocation6], 1

</llo_original>
